<compile_context>
chip_gen: v7x
topology: tpu7x:2x2x1
jax: 0.10.0
libtpu: 0.0.40
codegen_flags: <defaults>
</compile_context>

<pallas_src>
import functools

import jax
import jax.numpy as jnp
from jax.experimental import pallas as pl
from jax.experimental.pallas import tpu as pltpu

LAYER_SIZE = [3, 3, 3, 3, 3, 1]
USE_SHORTCUT = True

F_PAD = 8                        # in-VMEM/vreg sublane padding (real feature dims <= 3)
LANE = 128                       # batch lives on the 128-lane axis
MAX_TILE_B = 64 * 1024           # lanes per grid step (~2 MiB per [8, tile_b] f32 slab)
MIN_LANES_PER_CORE = 16 * 1024   # force >=2 tiles above 2x this so v7x's 2 TCs share work
VMEM_LIMIT_BYTES = 48 * 1024 * 1024   # < v7x's 64 MiB physical, > v5e's 16 MiB default


def _round_up(n, m):
    return ((n + m - 1) // m) * m


def _cdiv(a, b):
    return (a + b - 1) // b


def _gelu(x):
    # tanh-approximation GELU (matches the custom GELU() module in the reference).
    return 0.5 * x * (
        1.0 + jnp.tanh(jnp.sqrt(2.0 / jnp.pi) * (x + 0.044715 * x * x * x))
    )


def _deep_nn_kernel(x_ref, p_ref, out_ref, x8_ref, *, shortcuts, f_in):
    """x_ref: [f_in, tile_b]; p_ref: [n_layers, F_PAD, F_PAD+1] (W^T | b packed);
    out_ref: [out_features, tile_b]; x8_ref: [F_PAD, tile_b] VMEM scratch.

    `shortcuts` is a static tuple of bools derived from UNPADDED fan_in==fan_out,
    mirroring the PyTorch `x.shape == layer_output.shape` check.
    """
    n_out = out_ref.shape[0]

    # Stage the (f_in, tile_b) block into an 8-sublane slab. Rows f_in..7 are
    # zeroed every step (never trust uninitialized VMEM -> no NaN/Inf leakage),
    # and zero-padded weight rows/cols + gelu(0)==0 keep them exactly zero
    # through every layer and residual.
    x8_ref[...] = jnp.zeros_like(x8_ref)
    x8_ref[:f_in, :] = x_ref[...]
    x = x8_ref[...]                                   # [F_PAD, tile_b]

    for l, has_shortcut in enumerate(shortcuts):      # statically unrolled
        layer = p_ref[l]                              # [F_PAD, F_PAD+1]
        wt = layer[:, :F_PAD]                         # [F_PAD, F_PAD] (out x in)
        b = layer[:, F_PAD:]                          # [F_PAD, 1] -> broadcasts over lanes
        y = _gelu(jnp.dot(wt, x, preferred_element_type=jnp.float32) + b)
        x = x + y if has_shortcut else y

    out_ref[...] = x[:n_out, :]                       # store only the real output rows


def make_params(key, layer_size=LAYER_SIZE):
    """Deterministic nn.Linear-style init: U(-1/sqrt(fan_in), 1/sqrt(fan_in))."""
    params = []
    for i in range(len(layer_size) - 1):
        fan_in, fan_out = layer_size[i], layer_size[i + 1]
        key, kw, kb = jax.random.split(key, 3)
        bound = 1.0 / float(fan_in) ** 0.5
        w = jax.random.uniform(kw, (fan_in, fan_out), jnp.float32, -bound, bound)
        b = jax.random.uniform(kb, (fan_out,), jnp.float32, -bound, bound)
        params.append((w, b))
    return params


def prepare_params(params, use_shortcut=USE_SHORTCUT):
    """One-time pad + transpose + pack of all layers into a single array:
    packed[l, :, :F_PAD] = W_l^T (zero-padded), packed[l, :, F_PAD] = b_l."""
    n_layers = len(params)
    packed = jnp.zeros((n_layers, F_PAD, F_PAD + 1), jnp.float32)
    shortcuts = []
    for l, (w, b) in enumerate(params):
        fi, fo = w.shape
        packed = packed.at[l, :fo, :fi].set(w.T)
        packed = packed.at[l, :fo, F_PAD].set(b)
        shortcuts.append(bool(use_shortcut and fi == fo))
    out_features = params[-1][0].shape[1]
    return packed, tuple(shortcuts), out_features


def exam_deep_nn(x, packed_params, shortcuts, out_features):
    """x: [B, layer_size[0]] float32 -> [B, out_features] float32."""
    B, F_in = x.shape
    n_layers = packed_params.shape[0]

    # Pad batch only to a lane multiple; pick an even number of tiles when there
    # is enough work so v7x's two TensorCores both get batch tiles.
    b128 = _round_up(B, LANE)
    n_tiles = _cdiv(b128, MAX_TILE_B)
    if b128 >= 2 * MIN_LANES_PER_CORE:
        n_tiles = max(n_tiles, 2)
        n_tiles += n_tiles % 2
    tile_b = _round_up(_cdiv(b128, n_tiles), LANE)
    b_pad = n_tiles * tile_b

    # Minimal wrapper pre-pass: only the real F_in rows, batch padded only to b_pad.
    x_t = x.astype(jnp.float32).T                  # [F_in, B]
    if b_pad != B:
        x_t = jnp.pad(x_t, ((0, 0), (0, b_pad - B)))

    kernel = functools.partial(_deep_nn_kernel, shortcuts=shortcuts, f_in=F_in)

    in_specs = [
        # Activations: tiled + pipelined over the batch (lane) axis, real rows only.
        pl.BlockSpec((F_in, tile_b), lambda i: (0, i)),
        # Packed params: one full-array block, constant index_map -> VMEM-resident.
        pl.BlockSpec(packed_params.shape, lambda i: (0, 0, 0)),
    ]
    out_spec = pl.BlockSpec((out_features, tile_b), lambda i: (0, i))

    cost = pl.CostEstimate(
        flops=2 * F_PAD * F_PAD * b_pad * n_layers,
        transcendentals=F_PAD * b_pad * n_layers,          # tanh per element/layer
        bytes_accessed=4 * (F_in + out_features) * b_pad + int(packed_params.size) * 4,
    )

    out_padded = pl.pallas_call(
        kernel,
        out_shape=jax.ShapeDtypeStruct((out_features, b_pad), jnp.float32),
        grid=(n_tiles,),
        in_specs=in_specs,
        out_specs=out_spec,
        scratch_shapes=[pltpu.VMEM((F_PAD, tile_b), jnp.float32)],
        compiler_params=pltpu.CompilerParams(
            dimension_semantics=("parallel",),   # shards batch tiles across v7x's 2 TCs
            vmem_limit_bytes=VMEM_LIMIT_BYTES,
        ),
        cost_estimate=cost,
    )(x_t, packed_params)

    # Batch is lane-dense; drop padded lanes and transpose back to [B, out_features].
    return out_padded[:, :B].T


def _reference(x, params, use_shortcut=USE_SHORTCUT):
    """Pure-JAX reference of the PyTorch forward, for a correctness check."""
    h = x.astype(jnp.float32)
    for (w, b) in params:
        y = _gelu(h @ w + b)
        if use_shortcut and h.shape == y.shape:
            h = h + y
        else:
            h = y
    return h


if __name__ == "__main__":
    key = jax.random.PRNGKey(0)
    k_param, k1, k2, k3 = jax.random.split(key, 4)

    params = make_params(k_param, LAYER_SIZE)
    packed, shortcuts, out_features = prepare_params(params, USE_SHORTCUT)

    # Small shape consistent with the module (batch=8, in_features=3).
    x = jax.random.normal(k1, (8, LAYER_SIZE[0]), dtype=jnp.float32)
    out = jax.block_until_ready(exam_deep_nn(x, packed, shortcuts, out_features))
    ref = _reference(x, params, USE_SHORTCUT)
    assert out.shape == (8, LAYER_SIZE[-1]), out.shape
    assert jnp.allclose(out, ref, atol=1e-5, rtol=1e-5), "mismatch vs reference (B=8)"

    # Non-lane-multiple batch: pads only 2500 -> 2560 lanes (single tile).
    x2 = jax.random.normal(k2, (2500, LAYER_SIZE[0]), dtype=jnp.float32)
    out2 = jax.block_until_ready(exam_deep_nn(x2, packed, shortcuts, out_features))
    ref2 = _reference(x2, params, USE_SHORTCUT)
    assert out2.shape == (2500, LAYER_SIZE[-1]), out2.shape
    assert jnp.allclose(out2, ref2, atol=1e-5, rtol=1e-5), "mismatch vs reference (B=2500)"

    # Batch large enough to force >= 2 grid tiles (multi-tile / megacore path).
    x3 = jax.random.normal(k3, (40000, LAYER_SIZE[0]), dtype=jnp.float32)
    out3 = jax.block_until_ready(exam_deep_nn(x3, packed, shortcuts, out_features))
    ref3 = _reference(x3, params, USE_SHORTCUT)
    assert out3.shape == (40000, LAYER_SIZE[-1]), out3.shape
    assert jnp.allclose(out3, ref3, atol=1e-5, rtol=1e-5), "mismatch vs reference (B=40000)"

    print("KERNEL_OK")
</pallas_src>

<mosaic_0001>
module attributes {stable_mosaic.version = 11 : i64} {
  func.func @_deep_nn_kernel(%arg0: i32, %arg1: memref<3x128xf32, #tpu.memory_space<vmem>>, %arg2: memref<5x8x9xf32, #tpu.memory_space<vmem>>, %arg3: memref<1x128xf32, #tpu.memory_space<vmem>>, %arg4: memref<8x128xf32, #tpu.memory_space<vmem>>) attributes {dimension_semantics = [#tpu.dimension_semantics<parallel>], iteration_bounds = array<i64: 1>, scalar_prefetch = 0 : i64, scratch_operands = 1 : i64, tpu.core_type = #tpu.core_type<tc>, window_params = [{transform_indices = @transform_0, window_bounds = array<i64: 3, 128>}, {pipeline_mode = #tpu.pipeline_mode<synchronous>, transform_indices = @transform_1, window_bounds = array<i64: 5, 8, 9>}, {transform_indices = @transform_2, window_bounds = array<i64: 1, 128>}]} {
    %cst = arith.constant 0.000000e+00 : f32
    %0 = vector.broadcast %cst : f32 to vector<8x128xf32>
    %c0 = arith.constant 0 : index
    %c0_0 = arith.constant 0 : index
    %1 = vector.load %arg4[%c0, %c0_0] : memref<8x128xf32, #tpu.memory_space<vmem>>, vector<8x128xf32>
    tpu.vector_store %arg4[%c0, %c0_0], %0 {strides = array<i32>} : memref<8x128xf32, #tpu.memory_space<vmem>>, vector<8x128xf32>,
    %c0_1 = arith.constant 0 : index
    %c0_2 = arith.constant 0 : index
    %2 = vector.load %arg1[%c0_1, %c0_2] : memref<3x128xf32, #tpu.memory_space<vmem>>, vector<3x128xf32>
    %c0_3 = arith.constant 0 : index
    %c0_4 = arith.constant 0 : index
    %3 = vector.load %arg4[%c0_3, %c0_4] : memref<8x128xf32, #tpu.memory_space<vmem>>, vector<3x128xf32>
    tpu.vector_store %arg4[%c0_3, %c0_4], %2 {strides = array<i32>} : memref<8x128xf32, #tpu.memory_space<vmem>>, vector<3x128xf32>,
    %c0_5 = arith.constant 0 : index
    %c0_6 = arith.constant 0 : index
    %4 = vector.load %arg4[%c0_5, %c0_6] : memref<8x128xf32, #tpu.memory_space<vmem>>, vector<8x128xf32>
    %c0_7 = arith.constant 0 : index
    %c0_8 = arith.constant 0 : index
    %c0_9 = arith.constant 0 : index
    %5 = vector.load %arg2[%c0_7, %c0_8, %c0_9] : memref<5x8x9xf32, #tpu.memory_space<vmem>>, vector<1x8x9xf32>
    %6 = vector.shape_cast %5 : vector<1x8x9xf32> to vector<8x9xf32>
    %7 = vector.extract_strided_slice %6 {offsets = [0, 0], sizes = [8, 8], strides = [1, 1]} : vector<8x9xf32> to vector<8x8xf32>
    %8 = vector.extract_strided_slice %6 {offsets = [0, 8], sizes = [8, 1], strides = [1, 1]} : vector<8x9xf32> to vector<8x1xf32>
    %cst_10 = arith.constant dense<0.000000e+00> : vector<8x128xf32>
    %9 = tpu.matmul %7, %4, %cst_10 {dimension_numbers = #tpu.dot_dimension_numbers<[1], [0], [0], [1], [0, 0, 1, 1], [], []>} : vector<8x8xf32>, vector<8x128xf32>, vector<8x128xf32> -> vector<8x128xf32>
    %10 = vector.broadcast %8 : vector<8x1xf32> to vector<8x128xf32>
    %11 = arith.addf %9, %10 : vector<8x128xf32>
    %cst_11 = arith.constant 5.000000e-01 : f32
    %12 = vector.broadcast %cst_11 : f32 to vector<8x128xf32>
    %13 = arith.mulf %12, %11 : vector<8x128xf32>
    %cst_12 = arith.constant 0.636619746 : f32
    %14 = math.sqrt %cst_12 : f32
    %cst_13 = arith.constant 4.471500e-02 : f32
    %15 = vector.broadcast %cst_13 : f32 to vector<8x128xf32>
    %16 = arith.mulf %15, %11 : vector<8x128xf32>
    %17 = arith.mulf %16, %11 : vector<8x128xf32>
    %18 = arith.mulf %17, %11 : vector<8x128xf32>
    %19 = arith.addf %11, %18 : vector<8x128xf32>
    %20 = vector.broadcast %14 : f32 to vector<8x128xf32>
    %21 = arith.mulf %20, %19 : vector<8x128xf32>
    %22 = math.tanh %21 : vector<8x128xf32>
    %cst_14 = arith.constant 1.000000e+00 : f32
    %23 = vector.broadcast %cst_14 : f32 to vector<8x128xf32>
    %24 = arith.addf %23, %22 : vector<8x128xf32>
    %25 = arith.mulf %13, %24 : vector<8x128xf32>
    %26 = arith.addf %4, %25 : vector<8x128xf32>
    %c1 = arith.constant 1 : index
    %c0_15 = arith.constant 0 : index
    %c0_16 = arith.constant 0 : index
    %27 = vector.load %arg2[%c1, %c0_15, %c0_16] : memref<5x8x9xf32, #tpu.memory_space<vmem>>, vector<1x8x9xf32>
    %28 = vector.shape_cast %27 : vector<1x8x9xf32> to vector<8x9xf32>
    %29 = vector.extract_strided_slice %28 {offsets = [0, 0], sizes = [8, 8], strides = [1, 1]} : vector<8x9xf32> to vector<8x8xf32>
    %30 = vector.extract_strided_slice %28 {offsets = [0, 8], sizes = [8, 1], strides = [1, 1]} : vector<8x9xf32> to vector<8x1xf32>
    %cst_17 = arith.constant dense<0.000000e+00> : vector<8x128xf32>
    %31 = tpu.matmul %29, %26, %cst_17 {dimension_numbers = #tpu.dot_dimension_numbers<[1], [0], [0], [1], [0, 0, 1, 1], [], []>} : vector<8x8xf32>, vector<8x128xf32>, vector<8x128xf32> -> vector<8x128xf32>
    %32 = vector.broadcast %30 : vector<8x1xf32> to vector<8x128xf32>
    %33 = arith.addf %31, %32 : vector<8x128xf32>
    %cst_18 = arith.constant 5.000000e-01 : f32
    %34 = vector.broadcast %cst_18 : f32 to vector<8x128xf32>
    %35 = arith.mulf %34, %33 : vector<8x128xf32>
    %cst_19 = arith.constant 0.636619746 : f32
    %36 = math.sqrt %cst_19 : f32
    %cst_20 = arith.constant 4.471500e-02 : f32
    %37 = vector.broadcast %cst_20 : f32 to vector<8x128xf32>
    %38 = arith.mulf %37, %33 : vector<8x128xf32>
    %39 = arith.mulf %38, %33 : vector<8x128xf32>
    %40 = arith.mulf %39, %33 : vector<8x128xf32>
    %41 = arith.addf %33, %40 : vector<8x128xf32>
    %42 = vector.broadcast %36 : f32 to vector<8x128xf32>
    %43 = arith.mulf %42, %41 : vector<8x128xf32>
    %44 = math.tanh %43 : vector<8x128xf32>
    %cst_21 = arith.constant 1.000000e+00 : f32
    %45 = vector.broadcast %cst_21 : f32 to vector<8x128xf32>
    %46 = arith.addf %45, %44 : vector<8x128xf32>
    %47 = arith.mulf %35, %46 : vector<8x128xf32>
    %48 = arith.addf %26, %47 : vector<8x128xf32>
    %c2 = arith.constant 2 : index
    %c0_22 = arith.constant 0 : index
    %c0_23 = arith.constant 0 : index
    %49 = vector.load %arg2[%c2, %c0_22, %c0_23] : memref<5x8x9xf32, #tpu.memory_space<vmem>>, vector<1x8x9xf32>
    %50 = vector.shape_cast %49 : vector<1x8x9xf32> to vector<8x9xf32>
    %51 = vector.extract_strided_slice %50 {offsets = [0, 0], sizes = [8, 8], strides = [1, 1]} : vector<8x9xf32> to vector<8x8xf32>
    %52 = vector.extract_strided_slice %50 {offsets = [0, 8], sizes = [8, 1], strides = [1, 1]} : vector<8x9xf32> to vector<8x1xf32>
    %cst_24 = arith.constant dense<0.000000e+00> : vector<8x128xf32>
    %53 = tpu.matmul %51, %48, %cst_24 {dimension_numbers = #tpu.dot_dimension_numbers<[1], [0], [0], [1], [0, 0, 1, 1], [], []>} : vector<8x8xf32>, vector<8x128xf32>, vector<8x128xf32> -> vector<8x128xf32>
    %54 = vector.broadcast %52 : vector<8x1xf32> to vector<8x128xf32>
    %55 = arith.addf %53, %54 : vector<8x128xf32>
    %cst_25 = arith.constant 5.000000e-01 : f32
    %56 = vector.broadcast %cst_25 : f32 to vector<8x128xf32>
    %57 = arith.mulf %56, %55 : vector<8x128xf32>
    %cst_26 = arith.constant 0.636619746 : f32
    %58 = math.sqrt %cst_26 : f32
    %cst_27 = arith.constant 4.471500e-02 : f32
    %59 = vector.broadcast %cst_27 : f32 to vector<8x128xf32>
    %60 = arith.mulf %59, %55 : vector<8x128xf32>
    %61 = arith.mulf %60, %55 : vector<8x128xf32>
    %62 = arith.mulf %61, %55 : vector<8x128xf32>
    %63 = arith.addf %55, %62 : vector<8x128xf32>
    %64 = vector.broadcast %58 : f32 to vector<8x128xf32>
    %65 = arith.mulf %64, %63 : vector<8x128xf32>
    %66 = math.tanh %65 : vector<8x128xf32>
    %cst_28 = arith.constant 1.000000e+00 : f32
    %67 = vector.broadcast %cst_28 : f32 to vector<8x128xf32>
    %68 = arith.addf %67, %66 : vector<8x128xf32>
    %69 = arith.mulf %57, %68 : vector<8x128xf32>
    %70 = arith.addf %48, %69 : vector<8x128xf32>
    %c3 = arith.constant 3 : index
    %c0_29 = arith.constant 0 : index
    %c0_30 = arith.constant 0 : index
    %71 = vector.load %arg2[%c3, %c0_29, %c0_30] : memref<5x8x9xf32, #tpu.memory_space<vmem>>, vector<1x8x9xf32>
    %72 = vector.shape_cast %71 : vector<1x8x9xf32> to vector<8x9xf32>
    %73 = vector.extract_strided_slice %72 {offsets = [0, 0], sizes = [8, 8], strides = [1, 1]} : vector<8x9xf32> to vector<8x8xf32>
    %74 = vector.extract_strided_slice %72 {offsets = [0, 8], sizes = [8, 1], strides = [1, 1]} : vector<8x9xf32> to vector<8x1xf32>
    %cst_31 = arith.constant dense<0.000000e+00> : vector<8x128xf32>
    %75 = tpu.matmul %73, %70, %cst_31 {dimension_numbers = #tpu.dot_dimension_numbers<[1], [0], [0], [1], [0, 0, 1, 1], [], []>} : vector<8x8xf32>, vector<8x128xf32>, vector<8x128xf32> -> vector<8x128xf32>
    %76 = vector.broadcast %74 : vector<8x1xf32> to vector<8x128xf32>
    %77 = arith.addf %75, %76 : vector<8x128xf32>
    %cst_32 = arith.constant 5.000000e-01 : f32
    %78 = vector.broadcast %cst_32 : f32 to vector<8x128xf32>
    %79 = arith.mulf %78, %77 : vector<8x128xf32>
    %cst_33 = arith.constant 0.636619746 : f32
    %80 = math.sqrt %cst_33 : f32
    %cst_34 = arith.constant 4.471500e-02 : f32
    %81 = vector.broadcast %cst_34 : f32 to vector<8x128xf32>
    %82 = arith.mulf %81, %77 : vector<8x128xf32>
    %83 = arith.mulf %82, %77 : vector<8x128xf32>
    %84 = arith.mulf %83, %77 : vector<8x128xf32>
    %85 = arith.addf %77, %84 : vector<8x128xf32>
    %86 = vector.broadcast %80 : f32 to vector<8x128xf32>
    %87 = arith.mulf %86, %85 : vector<8x128xf32>
    %88 = math.tanh %87 : vector<8x128xf32>
    %cst_35 = arith.constant 1.000000e+00 : f32
    %89 = vector.broadcast %cst_35 : f32 to vector<8x128xf32>
    %90 = arith.addf %89, %88 : vector<8x128xf32>
    %91 = arith.mulf %79, %90 : vector<8x128xf32>
    %92 = arith.addf %70, %91 : vector<8x128xf32>
    %c4 = arith.constant 4 : index
    %c0_36 = arith.constant 0 : index
    %c0_37 = arith.constant 0 : index
    %93 = vector.load %arg2[%c4, %c0_36, %c0_37] : memref<5x8x9xf32, #tpu.memory_space<vmem>>, vector<1x8x9xf32>
    %94 = vector.shape_cast %93 : vector<1x8x9xf32> to vector<8x9xf32>
    %95 = vector.extract_strided_slice %94 {offsets = [0, 0], sizes = [8, 8], strides = [1, 1]} : vector<8x9xf32> to vector<8x8xf32>
    %96 = vector.extract_strided_slice %94 {offsets = [0, 8], sizes = [8, 1], strides = [1, 1]} : vector<8x9xf32> to vector<8x1xf32>
    %cst_38 = arith.constant dense<0.000000e+00> : vector<8x128xf32>
    %97 = tpu.matmul %95, %92, %cst_38 {dimension_numbers = #tpu.dot_dimension_numbers<[1], [0], [0], [1], [0, 0, 1, 1], [], []>} : vector<8x8xf32>, vector<8x128xf32>, vector<8x128xf32> -> vector<8x128xf32>
    %98 = vector.broadcast %96 : vector<8x1xf32> to vector<8x128xf32>
    %99 = arith.addf %97, %98 : vector<8x128xf32>
    %cst_39 = arith.constant 5.000000e-01 : f32
    %100 = vector.broadcast %cst_39 : f32 to vector<8x128xf32>
    %101 = arith.mulf %100, %99 : vector<8x128xf32>
    %cst_40 = arith.constant 0.636619746 : f32
    %102 = math.sqrt %cst_40 : f32
    %cst_41 = arith.constant 4.471500e-02 : f32
    %103 = vector.broadcast %cst_41 : f32 to vector<8x128xf32>
    %104 = arith.mulf %103, %99 : vector<8x128xf32>
    %105 = arith.mulf %104, %99 : vector<8x128xf32>
    %106 = arith.mulf %105, %99 : vector<8x128xf32>
    %107 = arith.addf %99, %106 : vector<8x128xf32>
    %108 = vector.broadcast %102 : f32 to vector<8x128xf32>
    %109 = arith.mulf %108, %107 : vector<8x128xf32>
    %110 = math.tanh %109 : vector<8x128xf32>
    %cst_42 = arith.constant 1.000000e+00 : f32
    %111 = vector.broadcast %cst_42 : f32 to vector<8x128xf32>
    %112 = arith.addf %111, %110 : vector<8x128xf32>
    %113 = arith.mulf %101, %112 : vector<8x128xf32>
    %114 = vector.extract_strided_slice %113 {offsets = [0, 0], sizes = [1, 128], strides = [1, 1]} : vector<8x128xf32> to vector<1x128xf32>
    %c0_43 = arith.constant 0 : index
    %c0_44 = arith.constant 0 : index
    %115 = vector.load %arg3[%c0_43, %c0_44] : memref<1x128xf32, #tpu.memory_space<vmem>>, vector<1x128xf32>
    tpu.vector_store %arg3[%c0_43, %c0_44], %114 {strides = array<i32>} : memref<1x128xf32, #tpu.memory_space<vmem>>, vector<1x128xf32>,
    return
  }
  func.func @transform_0(%arg0: i32) -> (i32, i32) {
    %c0_i32 = arith.constant 0 : i32
    %c0_i32_0 = arith.constant 0 : i32
    return %c0_i32, %arg0 : i32, i32
  }
  func.func @transform_1(%arg0: i32) -> (i32, i32, i32) {
    %c0_i32 = arith.constant 0 : i32
    %c0_i32_0 = arith.constant 0 : i32
    %c0_i32_1 = arith.constant 0 : i32
    %c0_i32_2 = arith.constant 0 : i32
    return %c0_i32, %c0_i32_0, %c0_i32_1 : i32, i32, i32
  }
  func.func @transform_2(%arg0: i32) -> (i32, i32) {
    %c0_i32 = arith.constant 0 : i32
    %c0_i32_0 = arith.constant 0 : i32
    return %c0_i32, %arg0 : i32, i32
  }
}

</mosaic_0001>

<llo_original>
// kernel: tpu_custom_call.1
$region0: #{tpu_custom_call.1}
  #allocation0 [shape = 'u32[]', space=smem, size = 0x4, offset = 0x4, fixed_abs, tag = 'smem constant byte address 0x4 - core index']
  #allocation1 [shape = 'u32[144,128]{1,0:T(1,128)}', space=vmem, size = 0x12000, scoped, tag = 'internal scratch']
  #allocation2 [shape = 'f32[8,128]{1,0:T(8,128)}', space=vmem, size = 0x1000, scoped, tag = 'scratch operand']
  %s0 = inlined_call_operand.hbm [shape: f32[3,128], index: 0, kind: input, shape index: {}]
  %s1 = inlined_call_operand.hbm [shape: f32[5,8,9], index: 1, kind: input, shape index: {}]
  %s2 = inlined_call_operand.hbm [shape: f32[1,128], index: 2, kind: output, shape index: {}]
  %s3 = sld [smem:[#allocation0]]
  $region26: #{tpu_custom_call.1} parent=0
    _
  %s5 = ssub.s32 1, %s3
  %s6 = scalar_select 0, %s5, %s3
  $region1: #{tpu_custom_call.1} parent=0
    #allocation3 [shape = 'u8[2048]{0}', space=vmem, size = 0x800, scoped, tag = 'input window, operand 0, single buffered']
    #allocation4 [shape = 's32[1]{0}', space=sflag, size = 0x4, scoped, tag = 'scoped memory for tpu_custom_call.1']
    #allocation5 [shape = 's32[1]{0}', space=sflag, size = 0x4, scoped, tag = 'scoped memory for tpu_custom_call.1']
    #allocation6 [shape = 'u8[20480]{0}', space=vmem, size = 0x5000, scoped, tag = 'input window, operand 1, single buffered']
    #allocation7 [shape = 's32[1]{0}', space=sflag, size = 0x4, scoped, tag = 'scoped memory for tpu_custom_call.1']
    #allocation8 [shape = 'u8[512]{0}', space=vmem, size = 0x400, scoped, tag = 'output window, operand 0, single buffered']
    %7 = vsyncpa [#allocation4], 0
    %8 = vsyncpa [#allocation7], 0
    %9 = vsyncpa [#allocation5], 0
    // Predicated region
    $region2: #{tpu_custom_call.1} parent=1 // pred_check
      _
    $region3: #{tpu_custom_call.1} parent=1 // pred_check_branch
      %11 = sbr.rel (0) target = $region5
    $region4: #{tpu_custom_call.1} parent=1 // pred_region
      %s13 = ssub.s32 64, 64
      %14 = vsyncadd [#allocation4], %s13
      %s16 = sshll.u32 [#allocation3], 4
      %s17 = int_to_ptr.vmem [resolvable:$true] %s16
      %19 = dma.hbm_to_vmem [thread:$0]  %s0, 64, %s17, [#allocation4]
    $region5: #{tpu_custom_call.1} parent=1 // pred_fallthru
      _
    // Predicated region
    $region6: #{tpu_custom_call.1} parent=1 // pred_check
      _
    $region7: #{tpu_custom_call.1} parent=1 // pred_check_branch
      %21 = sbr.rel (0) target = $region9
    $region8: #{tpu_custom_call.1} parent=1 // pred_region
      %s23 = ssub.s32 640, 640
      %24 = vsyncadd [#allocation7], %s23
      %s25 = sshll.u32 [#allocation6], 4
      %s26 = int_to_ptr.vmem [resolvable:$true] %s25
      %31 = dma.hbm_to_vmem [thread:$0]  %s1, 640, %s26, [#allocation7], 128, 128, 8
    $region9: #{tpu_custom_call.1} parent=1 // pred_fallthru
      _
    // Predicated region
    $region10: #{tpu_custom_call.1} parent=1 // pred_check
      _
    $region11: #{tpu_custom_call.1} parent=1 // pred_check_branch
      %33 = sbr.rel (0) target = $region13
    $region12: #{tpu_custom_call.1} parent=1 // pred_region
      %34 = dma.done [#allocation4], 64
    $region13: #{tpu_custom_call.1} parent=1 // pred_fallthru
      _
    // Predicated region
    $region14: #{tpu_custom_call.1} parent=1 // pred_check
      _
    $region15: #{tpu_custom_call.1} parent=1 // pred_check_branch
      %36 = sbr.rel (0) target = $region17
    $region16: #{tpu_custom_call.1} parent=1 // pred_region
      %37 = dma.done [#allocation7], 640
    $region17: #{tpu_custom_call.1} parent=1 // pred_fallthru
      _
    %38 = vst [vmem:[#allocation2] sm:$0xff] 0.0
    %v39 = vld [vmem:[#allocation3] sm:$0x7]
    %40 = vst [vmem:[#allocation2] sm:$0x7] %v39
    %v41 = vld [vmem:[#allocation2] sm:$0xff]
    %v42 = vld [vmem:[#allocation6] sm:$0xff]
    %44 = vset.pattern.permute.xlu0 8
    %45 = vperm.xlu0 %44, %v42
    %v46 = vpop.permute.xlu0 %45
    %vm48 = vcmask 64512
    %v49 = vsel %vm48, %v42, 0
    %51 = vmatprep.subr.mxu0 0.0
    %52 = vmatpush1.msra.mxu0 %v41
    %53 = vmatprep.subr.mxu0 0.0
    %54 = vmatpush1.msra.mxu0 0.0
    %55 = vmatprep.subr.mxu0 0.0
    %56 = vmatpush1.msra.mxu0 0.0
    %57 = vmatprep.subr.mxu0 0.0
    %58 = vmatpush1.msra.mxu0 0.0
    %59 = vmatprep.subr.mxu0 0.0
    %60 = vmatpush1.msra.mxu0 0.0
    %61 = vmatprep.subr.mxu0 0.0
    %62 = vmatpush1.msra.mxu0 0.0
    %63 = vmatprep.subr.mxu0 0.0
    %64 = vmatpush1.msra.mxu0 0.0
    %65 = vmatprep.subr.mxu0 0.0
    %66 = vmatpush1.msra.mxu0 0.0
    %67 = vmatprep.subr.mxu0 0.0
    %68 = vmatpush1.msra.mxu0 0.0
    %69 = vmatprep.subr.mxu0 0.0
    %70 = vmatpush1.msra.mxu0 0.0
    %71 = vmatprep.subr.mxu0 0.0
    %72 = vmatpush1.msra.mxu0 0.0
    %73 = vmatprep.subr.mxu0 0.0
    %74 = vmatpush1.msra.mxu0 0.0
    %75 = vmatprep.subr.mxu0 0.0
    %76 = vmatpush1.msra.mxu0 0.0
    %77 = vmatprep.subr.mxu0 0.0
    %78 = vmatpush1.msra.mxu0 0.0
    %79 = vmatprep.subr.mxu0 0.0
    %80 = vmatpush1.msra.mxu0 0.0
    %81 = vmatprep.subr.mxu0 0.0
    %82 = vmatpush1.msra.mxu0 0.0
    %83 = vmatprep.subr.mxu0 0.0
    %84 = vmatpush1.msra.mxu0 0.0
    %85 = vmatprep.subr.mxu0 0.0
    %86 = vmatpush1.msra.mxu0 0.0
    %87 = vmatprep.subr.mxu0 0.0
    %88 = vmatpush1.msra.mxu0 0.0
    %89 = vmatprep.subr.mxu0 0.0
    %90 = vmatpush1.msra.mxu0 0.0
    %91 = vmatprep.subr.mxu0 0.0
    %92 = vmatpush1.msra.mxu0 0.0
    %93 = vmatprep.subr.mxu0 0.0
    %94 = vmatpush1.msra.mxu0 0.0
    %95 = vmatprep.subr.mxu0 0.0
    %96 = vmatpush1.msra.mxu0 0.0
    %97 = vmatprep.subr.mxu0 0.0
    %98 = vmatpush1.msra.mxu0 0.0
    %99 = vmatprep.subr.mxu0 0.0
    %100 = vmatpush1.msra.mxu0 0.0
    %101 = vmatprep.subr.mxu0 0.0
    %102 = vmatpush1.msra.mxu0 0.0
    %103 = vmatprep.subr.mxu0 0.0
    %104 = vmatpush1.msra.mxu0 0.0
    %105 = vmatprep.subr.mxu0 0.0
    %106 = vmatpush1.msra.mxu0 0.0
    %107 = vmatprep.subr.mxu0 0.0
    %108 = vmatpush1.msra.mxu0 0.0
    %109 = vmatprep.subr.mxu0 0.0
    %110 = vmatpush1.msra.mxu0 0.0
    %111 = vmatprep.subr.mxu0 0.0
    %112 = vmatpush1.msra.mxu0 0.0
    %113 = vmatprep.subr.mxu0 0.0
    %114 = vmatpush1.msra.mxu0 0.0
    %115 = vmatprep.mubr.f32.mxu0 0.0
    %116 = vmatmul.mubr.f32.gmra.mrb[0].mxu0 %v49
    %v117 = vpop.f32.mrb[0].mxu0
    %v118 = vadd.f32 %v46, %v117
    %v119 = vpop.f32.mrb[0].mxu0
    %120 = vdwg.mxu0
    %v121 = vmul.f32 %v118, 0.5
    %v122 = vmul.f32 %v118, 0.044715
    %v123 = vmul.f32 %v122, %v118
    %v124 = vmul.f32 %v123, %v118
    %v125 = vadd.f32 %v118, %v124
    %v126 = vmul.f32 %v125, 0.7978845
    %v127 = vtanh.pop %v126
    %v128 = vadd.f32 %v127, 1.0
    %v129 = vmul.f32 %v121, %v128
    %v130 = vadd.f32 %v41, %v129
    %s131 = scalar_lea.vmem [#allocation6], 8
    %v132 = vld [vmem:[%s131] sm:$0xff]
    %134 = vset.pattern.permute.xlu0 8
    %135 = vperm.xlu0 %134, %v132
    %v136 = vpop.permute.xlu0 %135
    %v138 = vsel %vm48, %v132, 0
    %140 = vmatprep.subr.mxu0 0.0
    %141 = vmatpush1.msra.mxu0 %v130
    %142 = vmatprep.subr.mxu0 0.0
    %143 = vmatpush1.msra.mxu0 0.0
    %144 = vmatprep.subr.mxu0 0.0
    %145 = vmatpush1.msra.mxu0 0.0
    %146 = vmatprep.subr.mxu0 0.0
    %147 = vmatpush1.msra.mxu0 0.0
    %148 = vmatprep.subr.mxu0 0.0
    %149 = vmatpush1.msra.mxu0 0.0
    %150 = vmatprep.subr.mxu0 0.0
    %151 = vmatpush1.msra.mxu0 0.0
    %152 = vmatprep.subr.mxu0 0.0
    %153 = vmatpush1.msra.mxu0 0.0
    %154 = vmatprep.subr.mxu0 0.0
    %155 = vmatpush1.msra.mxu0 0.0
    %156 = vmatprep.subr.mxu0 0.0
    %157 = vmatpush1.msra.mxu0 0.0
    %158 = vmatprep.subr.mxu0 0.0
    %159 = vmatpush1.msra.mxu0 0.0
    %160 = vmatprep.subr.mxu0 0.0
    %161 = vmatpush1.msra.mxu0 0.0
    %162 = vmatprep.subr.mxu0 0.0
    %163 = vmatpush1.msra.mxu0 0.0
    %164 = vmatprep.subr.mxu0 0.0
    %165 = vmatpush1.msra.mxu0 0.0
    %166 = vmatprep.subr.mxu0 0.0
    %167 = vmatpush1.msra.mxu0 0.0
    %168 = vmatprep.subr.mxu0 0.0
    %169 = vmatpush1.msra.mxu0 0.0
    %170 = vmatprep.subr.mxu0 0.0
    %171 = vmatpush1.msra.mxu0 0.0
    %172 = vmatprep.subr.mxu0 0.0
    %173 = vmatpush1.msra.mxu0 0.0
    %174 = vmatprep.subr.mxu0 0.0
    %175 = vmatpush1.msra.mxu0 0.0
    %176 = vmatprep.subr.mxu0 0.0
    %177 = vmatpush1.msra.mxu0 0.0
    %178 = vmatprep.subr.mxu0 0.0
    %179 = vmatpush1.msra.mxu0 0.0
    %180 = vmatprep.subr.mxu0 0.0
    %181 = vmatpush1.msra.mxu0 0.0
    %182 = vmatprep.subr.mxu0 0.0
    %183 = vmatpush1.msra.mxu0 0.0
    %184 = vmatprep.subr.mxu0 0.0
    %185 = vmatpush1.msra.mxu0 0.0
    %186 = vmatprep.subr.mxu0 0.0
    %187 = vmatpush1.msra.mxu0 0.0
    %188 = vmatprep.subr.mxu0 0.0
    %189 = vmatpush1.msra.mxu0 0.0
    %190 = vmatprep.subr.mxu0 0.0
    %191 = vmatpush1.msra.mxu0 0.0
    %192 = vmatprep.subr.mxu0 0.0
    %193 = vmatpush1.msra.mxu0 0.0
    %194 = vmatprep.subr.mxu0 0.0
    %195 = vmatpush1.msra.mxu0 0.0
    %196 = vmatprep.subr.mxu0 0.0
    %197 = vmatpush1.msra.mxu0 0.0
    %198 = vmatprep.subr.mxu0 0.0
    %199 = vmatpush1.msra.mxu0 0.0
    %200 = vmatprep.subr.mxu0 0.0
    %201 = vmatpush1.msra.mxu0 0.0
    %202 = vmatprep.subr.mxu0 0.0
    %203 = vmatpush1.msra.mxu0 0.0
    %204 = vmatprep.mubr.f32.mxu0 0.0
    %205 = vmatmul.mubr.f32.gmra.mrb[0].mxu0 %v138
    %v206 = vpop.f32.mrb[0].mxu0
    %v207 = vadd.f32 %v136, %v206
    %v208 = vpop.f32.mrb[0].mxu0
    %209 = vdwg.mxu0
    %v210 = vmul.f32 %v207, 0.5
    %v211 = vmul.f32 %v207, 0.044715
    %v212 = vmul.f32 %v211, %v207
    %v213 = vmul.f32 %v212, %v207
    %v214 = vadd.f32 %v207, %v213
    %v215 = vmul.f32 %v214, 0.7978845
    %v216 = vtanh.pop %v215
    %v217 = vadd.f32 %v216, 1.0
    %v218 = vmul.f32 %v210, %v217
    %v219 = vadd.f32 %v130, %v218
    %s220 = scalar_lea.vmem [#allocation6], 16
    %v221 = vld [vmem:[%s220] sm:$0xff]
    %223 = vset.pattern.permute.xlu0 8
    %224 = vperm.xlu0 %223, %v221
    %v225 = vpop.permute.xlu0 %224
    %v227 = vsel %vm48, %v221, 0
    %229 = vmatprep.subr.mxu0 0.0
    %230 = vmatpush1.msra.mxu0 %v219
    %231 = vmatprep.subr.mxu0 0.0
    %232 = vmatpush1.msra.mxu0 0.0
    %233 = vmatprep.subr.mxu0 0.0
    %234 = vmatpush1.msra.mxu0 0.0
    %235 = vmatprep.subr.mxu0 0.0
    %236 = vmatpush1.msra.mxu0 0.0
    %237 = vmatprep.subr.mxu0 0.0
    %238 = vmatpush1.msra.mxu0 0.0
    %239 = vmatprep.subr.mxu0 0.0
    %240 = vmatpush1.msra.mxu0 0.0
    %241 = vmatprep.subr.mxu0 0.0
    %242 = vmatpush1.msra.mxu0 0.0
    %243 = vmatprep.subr.mxu0 0.0
    %244 = vmatpush1.msra.mxu0 0.0
    %245 = vmatprep.subr.mxu0 0.0
    %246 = vmatpush1.msra.mxu0 0.0
    %247 = vmatprep.subr.mxu0 0.0
    %248 = vmatpush1.msra.mxu0 0.0
    %249 = vmatprep.subr.mxu0 0.0
    %250 = vmatpush1.msra.mxu0 0.0
    %251 = vmatprep.subr.mxu0 0.0
    %252 = vmatpush1.msra.mxu0 0.0
    %253 = vmatprep.subr.mxu0 0.0
    %254 = vmatpush1.msra.mxu0 0.0
    %255 = vmatprep.subr.mxu0 0.0
    %256 = vmatpush1.msra.mxu0 0.0
    %257 = vmatprep.subr.mxu0 0.0
    %258 = vmatpush1.msra.mxu0 0.0
    %259 = vmatprep.subr.mxu0 0.0
    %260 = vmatpush1.msra.mxu0 0.0
    %261 = vmatprep.subr.mxu0 0.0
    %262 = vmatpush1.msra.mxu0 0.0
    %263 = vmatprep.subr.mxu0 0.0
    %264 = vmatpush1.msra.mxu0 0.0
    %265 = vmatprep.subr.mxu0 0.0
    %266 = vmatpush1.msra.mxu0 0.0
    %267 = vmatprep.subr.mxu0 0.0
    %268 = vmatpush1.msra.mxu0 0.0
    %269 = vmatprep.subr.mxu0 0.0
    %270 = vmatpush1.msra.mxu0 0.0
    %271 = vmatprep.subr.mxu0 0.0
    %272 = vmatpush1.msra.mxu0 0.0
    %273 = vmatprep.subr.mxu0 0.0
    %274 = vmatpush1.msra.mxu0 0.0
    %275 = vmatprep.subr.mxu0 0.0
    %276 = vmatpush1.msra.mxu0 0.0
    %277 = vmatprep.subr.mxu0 0.0
    %278 = vmatpush1.msra.mxu0 0.0
    %279 = vmatprep.subr.mxu0 0.0
    %280 = vmatpush1.msra.mxu0 0.0
    %281 = vmatprep.subr.mxu0 0.0
    %282 = vmatpush1.msra.mxu0 0.0
    %283 = vmatprep.subr.mxu0 0.0
    %284 = vmatpush1.msra.mxu0 0.0
    %285 = vmatprep.subr.mxu0 0.0
    %286 = vmatpush1.msra.mxu0 0.0
    %287 = vmatprep.subr.mxu0 0.0
    %288 = vmatpush1.msra.mxu0 0.0
    %289 = vmatprep.subr.mxu0 0.0
    %290 = vmatpush1.msra.mxu0 0.0
    %291 = vmatprep.subr.mxu0 0.0
    %292 = vmatpush1.msra.mxu0 0.0
    %293 = vmatprep.mubr.f32.mxu0 0.0
    %294 = vmatmul.mubr.f32.gmra.mrb[0].mxu0 %v227
    %v295 = vpop.f32.mrb[0].mxu0
    %v296 = vadd.f32 %v225, %v295
    %v297 = vpop.f32.mrb[0].mxu0
    %298 = vdwg.mxu0
    %v299 = vmul.f32 %v296, 0.5
    %v300 = vmul.f32 %v296, 0.044715
    %v301 = vmul.f32 %v300, %v296
    %v302 = vmul.f32 %v301, %v296
    %v303 = vadd.f32 %v296, %v302
    %v304 = vmul.f32 %v303, 0.7978845
    %v305 = vtanh.pop %v304
    %v306 = vadd.f32 %v305, 1.0
    %v307 = vmul.f32 %v299, %v306
    %v308 = vadd.f32 %v219, %v307
    %s309 = scalar_lea.vmem [#allocation6], 24
    %v310 = vld [vmem:[%s309] sm:$0xff]
    %312 = vset.pattern.permute.xlu0 8
    %313 = vperm.xlu0 %312, %v310
    %v314 = vpop.permute.xlu0 %313
    %v316 = vsel %vm48, %v310, 0
    %318 = vmatprep.subr.mxu0 0.0
    %319 = vmatpush1.msra.mxu0 %v308
    %320 = vmatprep.subr.mxu0 0.0
    %321 = vmatpush1.msra.mxu0 0.0
    %322 = vmatprep.subr.mxu0 0.0
    %323 = vmatpush1.msra.mxu0 0.0
    %324 = vmatprep.subr.mxu0 0.0
    %325 = vmatpush1.msra.mxu0 0.0
    %326 = vmatprep.subr.mxu0 0.0
    %327 = vmatpush1.msra.mxu0 0.0
    %328 = vmatprep.subr.mxu0 0.0
    %329 = vmatpush1.msra.mxu0 0.0
    %330 = vmatprep.subr.mxu0 0.0
    %331 = vmatpush1.msra.mxu0 0.0
    %332 = vmatprep.subr.mxu0 0.0
    %333 = vmatpush1.msra.mxu0 0.0
    %334 = vmatprep.subr.mxu0 0.0
    %335 = vmatpush1.msra.mxu0 0.0
    %336 = vmatprep.subr.mxu0 0.0
    %337 = vmatpush1.msra.mxu0 0.0
    %338 = vmatprep.subr.mxu0 0.0
    %339 = vmatpush1.msra.mxu0 0.0
    %340 = vmatprep.subr.mxu0 0.0
    %341 = vmatpush1.msra.mxu0 0.0
    %342 = vmatprep.subr.mxu0 0.0
    %343 = vmatpush1.msra.mxu0 0.0
    %344 = vmatprep.subr.mxu0 0.0
    %345 = vmatpush1.msra.mxu0 0.0
    %346 = vmatprep.subr.mxu0 0.0
    %347 = vmatpush1.msra.mxu0 0.0
    %348 = vmatprep.subr.mxu0 0.0
    %349 = vmatpush1.msra.mxu0 0.0
    %350 = vmatprep.subr.mxu0 0.0
    %351 = vmatpush1.msra.mxu0 0.0
    %352 = vmatprep.subr.mxu0 0.0
    %353 = vmatpush1.msra.mxu0 0.0
    %354 = vmatprep.subr.mxu0 0.0
    %355 = vmatpush1.msra.mxu0 0.0
    %356 = vmatprep.subr.mxu0 0.0
    %357 = vmatpush1.msra.mxu0 0.0
    %358 = vmatprep.subr.mxu0 0.0
    %359 = vmatpush1.msra.mxu0 0.0
    %360 = vmatprep.subr.mxu0 0.0
    %361 = vmatpush1.msra.mxu0 0.0
    %362 = vmatprep.subr.mxu0 0.0
    %363 = vmatpush1.msra.mxu0 0.0
    %364 = vmatprep.subr.mxu0 0.0
    %365 = vmatpush1.msra.mxu0 0.0
    %366 = vmatprep.subr.mxu0 0.0
    %367 = vmatpush1.msra.mxu0 0.0
    %368 = vmatprep.subr.mxu0 0.0
    %369 = vmatpush1.msra.mxu0 0.0
    %370 = vmatprep.subr.mxu0 0.0
    %371 = vmatpush1.msra.mxu0 0.0
    %372 = vmatprep.subr.mxu0 0.0
    %373 = vmatpush1.msra.mxu0 0.0
    %374 = vmatprep.subr.mxu0 0.0
    %375 = vmatpush1.msra.mxu0 0.0
    %376 = vmatprep.subr.mxu0 0.0
    %377 = vmatpush1.msra.mxu0 0.0
    %378 = vmatprep.subr.mxu0 0.0
    %379 = vmatpush1.msra.mxu0 0.0
    %380 = vmatprep.subr.mxu0 0.0
    %381 = vmatpush1.msra.mxu0 0.0
    %382 = vmatprep.mubr.f32.mxu0 0.0
    %383 = vmatmul.mubr.f32.gmra.mrb[0].mxu0 %v316
    %v384 = vpop.f32.mrb[0].mxu0
    %v385 = vadd.f32 %v314, %v384
    %v386 = vpop.f32.mrb[0].mxu0
    %387 = vdwg.mxu0
    %v388 = vmul.f32 %v385, 0.5
    %v389 = vmul.f32 %v385, 0.044715
    %v390 = vmul.f32 %v389, %v385
    %v391 = vmul.f32 %v390, %v385
    %v392 = vadd.f32 %v385, %v391
    %v393 = vmul.f32 %v392, 0.7978845
    %v394 = vtanh.pop %v393
    %v395 = vadd.f32 %v394, 1.0
    %v396 = vmul.f32 %v388, %v395
    %v397 = vadd.f32 %v308, %v396
    %s398 = scalar_lea.vmem [#allocation6], 32
    %v399 = vld [vmem:[%s398] sm:$0xff]
    %401 = vset.pattern.permute.xlu0 8
    %402 = vperm.xlu0 %401, %v399
    %v403 = vpop.permute.xlu0 %402
    %v405 = vsel %vm48, %v399, 0
    %407 = vmatprep.subr.mxu0 0.0
    %408 = vmatpush1.msra.mxu0 %v397
    %409 = vmatprep.subr.mxu0 0.0
    %410 = vmatpush1.msra.mxu0 0.0
    %411 = vmatprep.subr.mxu0 0.0
    %412 = vmatpush1.msra.mxu0 0.0
    %413 = vmatprep.subr.mxu0 0.0
    %414 = vmatpush1.msra.mxu0 0.0
    %415 = vmatprep.subr.mxu0 0.0
    %416 = vmatpush1.msra.mxu0 0.0
    %417 = vmatprep.subr.mxu0 0.0
    %418 = vmatpush1.msra.mxu0 0.0
    %419 = vmatprep.subr.mxu0 0.0
    %420 = vmatpush1.msra.mxu0 0.0
    %421 = vmatprep.subr.mxu0 0.0
    %422 = vmatpush1.msra.mxu0 0.0
    %423 = vmatprep.subr.mxu0 0.0
    %424 = vmatpush1.msra.mxu0 0.0
    %425 = vmatprep.subr.mxu0 0.0
    %426 = vmatpush1.msra.mxu0 0.0
    %427 = vmatprep.subr.mxu0 0.0
    %428 = vmatpush1.msra.mxu0 0.0
    %429 = vmatprep.subr.mxu0 0.0
    %430 = vmatpush1.msra.mxu0 0.0
    %431 = vmatprep.subr.mxu0 0.0
    %432 = vmatpush1.msra.mxu0 0.0
    %433 = vmatprep.subr.mxu0 0.0
    %434 = vmatpush1.msra.mxu0 0.0
    %435 = vmatprep.subr.mxu0 0.0
    %436 = vmatpush1.msra.mxu0 0.0
    %437 = vmatprep.subr.mxu0 0.0
    %438 = vmatpush1.msra.mxu0 0.0
    %439 = vmatprep.subr.mxu0 0.0
    %440 = vmatpush1.msra.mxu0 0.0
    %441 = vmatprep.subr.mxu0 0.0
    %442 = vmatpush1.msra.mxu0 0.0
    %443 = vmatprep.subr.mxu0 0.0
    %444 = vmatpush1.msra.mxu0 0.0
    %445 = vmatprep.subr.mxu0 0.0
    %446 = vmatpush1.msra.mxu0 0.0
    %447 = vmatprep.subr.mxu0 0.0
    %448 = vmatpush1.msra.mxu0 0.0
    %449 = vmatprep.subr.mxu0 0.0
    %450 = vmatpush1.msra.mxu0 0.0
    %451 = vmatprep.subr.mxu0 0.0
    %452 = vmatpush1.msra.mxu0 0.0
    %453 = vmatprep.subr.mxu0 0.0
    %454 = vmatpush1.msra.mxu0 0.0
    %455 = vmatprep.subr.mxu0 0.0
    %456 = vmatpush1.msra.mxu0 0.0
    %457 = vmatprep.subr.mxu0 0.0
    %458 = vmatpush1.msra.mxu0 0.0
    %459 = vmatprep.subr.mxu0 0.0
    %460 = vmatpush1.msra.mxu0 0.0
    %461 = vmatprep.subr.mxu0 0.0
    %462 = vmatpush1.msra.mxu0 0.0
    %463 = vmatprep.subr.mxu0 0.0
    %464 = vmatpush1.msra.mxu0 0.0
    %465 = vmatprep.subr.mxu0 0.0
    %466 = vmatpush1.msra.mxu0 0.0
    %467 = vmatprep.subr.mxu0 0.0
    %468 = vmatpush1.msra.mxu0 0.0
    %469 = vmatprep.subr.mxu0 0.0
    %470 = vmatpush1.msra.mxu0 0.0
    %471 = vmatprep.mubr.f32.mxu0 0.0
    %472 = vmatmul.mubr.f32.gmra.mrb[0].mxu0 %v405
    %v473 = vpop.f32.mrb[0].mxu0
    %v474 = vadd.f32 %v403, %v473
    %v475 = vpop.f32.mrb[0].mxu0
    %476 = vdwg.mxu0
    %v477 = vmul.f32 %v474, 0.5
    %v478 = vmul.f32 %v474, 0.044715
    %v479 = vmul.f32 %v478, %v474
    %v480 = vmul.f32 %v479, %v474
    %v481 = vadd.f32 %v474, %v480
    %v482 = vmul.f32 %v481, 0.7978845
    %v483 = vtanh.pop %v482
    %v484 = vadd.f32 %v483, 1.0
    %v485 = vmul.f32 %v477, %v484
    %486 = vst [vmem:[#allocation8] sm:$0x1] %v485
    // Predicated region
    $region18: #{tpu_custom_call.1} parent=1 // pred_check
      _
    $region19: #{tpu_custom_call.1} parent=1 // pred_check_branch
      %488 = sbr.rel (0) target = $region21
    $region20: #{tpu_custom_call.1} parent=1 // pred_region
      %s490 = ssub.s32 16, 16
      %491 = vsyncadd [#allocation5], %s490
      %s493 = sshll.u32 [#allocation8], 4
      %s494 = int_to_ptr.vmem [resolvable:$true] %s493
      %496 = dma.vmem_to_hbm [thread:$0]  %s494, 16, %s2, [#allocation5]
    $region21: #{tpu_custom_call.1} parent=1 // pred_fallthru
      _
    // Predicated region
    $region22: #{tpu_custom_call.1} parent=1 // pred_check
      _
    $region23: #{tpu_custom_call.1} parent=1 // pred_check_branch
      %498 = sbr.rel (0) target = $region25
    $region24: #{tpu_custom_call.1} parent=1 // pred_region
      %499 = dma.done [#allocation5], 16
    $region25: #{tpu_custom_call.1} parent=1 // pred_fallthru
      _
    %500 = vsyncpa [#allocation4], 1
    %501 = vsyncpa [#allocation7], 1
    %502 = vsyncpa [#allocation5], 1

</llo_original>
